<compile_context>
chip_gen: v6e
topology: v6e:2x2x1
jax: 0.10.0
libtpu: 0.0.40
codegen_flags: <defaults>
</compile_context>

<pallas_src>
import jax
import jax.numpy as jnp
from jax.experimental import pallas as pl
from jax.experimental.pallas import tpu as pltpu


def _make_adv_loss_kernel(true_b, block_b):
    """Kernel closure over the true batch size and the batch tile size."""
    inv_b = 1.0 / float(true_b)

    def kernel(tc_ref, pred_ref, out_ref, acc_ref):
        # tc_ref:   (1,)  int32 SMEM   — target class index
        # pred_ref: (TB, C) VMEM tile  — logits for this batch tile
        # out_ref:  (1, 1) f32 SMEM    — final scalar loss
        # acc_ref:  (1,)  f32 SMEM     — running sum of target log-probs
        i = pl.program_id(0)

        @pl.when(i == 0)
        def _init():
            acc_ref[0] = jnp.float32(0.0)

        x = pred_ref[...].astype(jnp.float32)  # (TB, C), f32 math (v5e-safe)
        tc = tc_ref[0]

        # Numerically-stable logsumexp pieces, per row (lane-axis reductions).
        m = jnp.max(x, axis=1, keepdims=True)                             # (TB, 1)
        lse = jnp.log(jnp.sum(jnp.exp(x - m), axis=1, keepdims=True))     # (TB, 1)

        # Gather x[:, tc] with a lane mask directly on the logits
        # (no full (TB, C) log_probs tensor is ever formed).
        col_ids = jax.lax.broadcasted_iota(jnp.int32, x.shape, 1)         # (TB, C)
        x_tc = jnp.sum(jnp.where(col_ids == tc, x, 0.0),
                       axis=1, keepdims=True)                             # (TB, 1)

        # log p[b, tc] per row; mask rows past the true batch (partial tile).
        contrib = x_tc - m - lse                                          # (TB, 1)
        row_ids = (jax.lax.broadcasted_iota(jnp.int32, contrib.shape, 0)
                   + i * block_b)
        contrib = jnp.where(row_ids < true_b, contrib, 0.0)

        # Single sublane reduce -> scalar accumulator in SMEM.
        acc_ref[0] += jnp.sum(contrib)

        @pl.when(i == pl.num_programs(0) - 1)
        def _finalize():
            out_ref[0, 0] = -acc_ref[0] * jnp.float32(inv_b)

    return kernel


def adversarial_loss(predictions, target_class, block_b=None):
    """predictions: (B, C) float array; target_class: python int in [0, C)."""
    B, C = predictions.shape
    target_class = int(target_class)
    if not (0 <= target_class < C):
        # PyTorch indexing would raise; the lane mask would silently yield 0.
        raise ValueError(f"target_class={target_class} out of range [0, {C})")

    if block_b is None:
        # ~2 MiB per f32 input tile => ~4 MiB double-buffered; safe under the
        # v7x 32 MiB default scoped-VMEM budget (and v5e/v6e).
        max_rows = max(8, (2 * 1024 * 1024) // max(C * 4, 1))
        block_b = B if B <= max_rows else (max_rows // 8) * 8
    block_b = min(int(block_b), B)
    if block_b < B:
        # Partial-batch tiles must have a sublane-aligned (multiple-of-8) height.
        block_b = max(8, (block_b // 8) * 8)

    grid = (pl.cdiv(B, block_b),)
    tc = jnp.asarray([target_class], dtype=jnp.int32)
    kernel = _make_adv_loss_kernel(B, block_b)

    out = pl.pallas_call(
        kernel,
        out_shape=jax.ShapeDtypeStruct((1, 1), jnp.float32),
        grid=grid,
        in_specs=[
            pl.BlockSpec(memory_space=pltpu.SMEM),          # target_class scalar
            pl.BlockSpec((block_b, C), lambda i: (i, 0)),   # batch tile of logits
        ],
        out_specs=pl.BlockSpec(memory_space=pltpu.SMEM),    # scalar loss
        scratch_shapes=[pltpu.SMEM((1,), jnp.float32)],     # running sum
        compiler_params=pltpu.CompilerParams(
            # Accumulator is carried across batch tiles -> reduction axis.
            dimension_semantics=("arbitrary",),
        ),
    )(tc, predictions)
    return out[0, 0]


if __name__ == "__main__":
    key = jax.random.PRNGKey(0)
    target_class = 3

    # Case 1: single-tile path (block == full array), batch=8, classes=16.
    B1, C1 = 8, 16
    preds1 = jax.random.normal(key, (B1, C1), dtype=jnp.float32)
    loss1 = jax.block_until_ready(adversarial_loss(preds1, target_class))
    ref1 = -jnp.mean(jax.nn.log_softmax(preds1, axis=1)[:, target_class])
    assert jnp.allclose(loss1, ref1, atol=1e-5, rtol=1e-5), (loss1, ref1)

    # Case 2: gridded path with a partial last tile (B=20, TB=8 -> 3 tiles).
    B2, C2 = 20, 16
    preds2 = jax.random.normal(jax.random.PRNGKey(1), (B2, C2), dtype=jnp.float32)
    loss2 = jax.block_until_ready(adversarial_loss(preds2, target_class, block_b=8))
    ref2 = -jnp.mean(jax.nn.log_softmax(preds2, axis=1)[:, target_class])
    assert jnp.allclose(loss2, ref2, atol=1e-5, rtol=1e-5), (loss2, ref2)

    print("KERNEL_OK")
</pallas_src>

<mosaic_0001>
module attributes {stable_mosaic.version = 11 : i64} {
  func.func @kernel(%arg0: i32, %arg1: memref<1xi32, #tpu.memory_space<smem>>, %arg2: memref<8x16xf32, #tpu.memory_space<vmem>>, %arg3: memref<1x1xf32, #tpu.memory_space<smem>>, %arg4: memref<1xf32, #tpu.memory_space<smem>>) attributes {dimension_semantics = [#tpu.dimension_semantics<arbitrary>], iteration_bounds = array<i64: 1>, scalar_prefetch = 0 : i64, scratch_operands = 1 : i64, tpu.core_type = #tpu.core_type<tc>, window_params = [{transform_indices = @transform_0, window_bounds = array<i64: 1>}, {transform_indices = @transform_1, window_bounds = array<i64: 8, 16>}, {transform_indices = @transform_2, window_bounds = array<i64: 1, 1>}]} {
    %c0_i32 = arith.constant 0 : i32
    %0 = arith.cmpi eq, %arg0, %c0_i32 : i32
    %1 = arith.extui %0 : i1 to i32
    %c0_i32_0 = arith.constant 0 : i32
    %2 = arith.cmpi ne, %1, %c0_i32_0 : i32
    scf.if %2 {
      %cst_13 = arith.constant 0.000000e+00 : f32
      %c0_14 = arith.constant 0 : index
      %40 = memref.load %arg4[%c0_14] : memref<1xf32, #tpu.memory_space<smem>>
      memref.store %cst_13, %arg4[%c0_14] : memref<1xf32, #tpu.memory_space<smem>>
    } else {
    }
    %c0 = arith.constant 0 : index
    %c0_1 = arith.constant 0 : index
    %3 = vector.load %arg2[%c0, %c0_1] : memref<8x16xf32, #tpu.memory_space<vmem>>, vector<8x16xf32>
    %c0_2 = arith.constant 0 : index
    %4 = memref.load %arg1[%c0_2] : memref<1xi32, #tpu.memory_space<smem>>
    %cst = arith.constant dense<0xFF800000> : vector<8xf32>
    %5 = vector.multi_reduction <maximumf>, %3, %cst [1] : vector<8x16xf32> to vector<8xf32>
    %6 = vector.shape_cast %5 : vector<8xf32> to vector<8x1xf32>
    %7 = vector.broadcast %6 : vector<8x1xf32> to vector<8x16xf32>
    %8 = arith.subf %3, %7 : vector<8x16xf32>
    %9 = math.exp %8 : vector<8x16xf32>
    %cst_3 = arith.constant dense<0.000000e+00> : vector<8xf32>
    %10 = vector.multi_reduction <add>, %9, %cst_3 [1] : vector<8x16xf32> to vector<8xf32>
    %11 = vector.shape_cast %10 : vector<8xf32> to vector<8x1xf32>
    %12 = math.log %11 : vector<8x1xf32>
    %13 = tpu.iota {dimensions = array<i32: 1>} : vector<8x16xi32>
    %14 = vector.broadcast %4 : i32 to vector<8x16xi32>
    %15 = arith.cmpi eq, %13, %14 : vector<8x16xi32>
    %cst_4 = arith.constant 0.000000e+00 : f32
    %16 = vector.broadcast %cst_4 : f32 to vector<8x16xf32>
    %17 = arith.select %15, %3, %16 : vector<8x16xi1>, vector<8x16xf32>
    %cst_5 = arith.constant dense<0.000000e+00> : vector<8xf32>
    %18 = vector.multi_reduction <add>, %17, %cst_5 [1] : vector<8x16xf32> to vector<8xf32>
    %19 = vector.shape_cast %18 : vector<8xf32> to vector<8x1xf32>
    %20 = arith.subf %19, %6 : vector<8x1xf32>
    %21 = arith.subf %20, %12 : vector<8x1xf32>
    %22 = tpu.iota {dimensions = array<i32: 0>} : vector<8x1xi32>
    %c8_i32 = arith.constant 8 : i32
    %23 = arith.muli %arg0, %c8_i32 : i32
    %24 = vector.broadcast %23 : i32 to vector<8x1xi32>
    %25 = arith.addi %22, %24 : vector<8x1xi32>
    %c8_i32_6 = arith.constant 8 : i32
    %26 = vector.broadcast %c8_i32_6 : i32 to vector<8x1xi32>
    %27 = arith.cmpi slt, %25, %26 : vector<8x1xi32>
    %cst_7 = arith.constant 0.000000e+00 : f32
    %28 = vector.broadcast %cst_7 : f32 to vector<8x1xf32>
    %29 = arith.select %27, %21, %28 : vector<8x1xi1>, vector<8x1xf32>
    %c0_8 = arith.constant 0 : index
    %30 = memref.load %arg4[%c0_8] : memref<1xf32, #tpu.memory_space<smem>>
    %31 = vector.shape_cast %29 : vector<8x1xf32> to vector<1x8x1xf32>
    %cst_9 = arith.constant dense<0.000000e+00> : vector<1xf32>
    %32 = vector.multi_reduction <add>, %31, %cst_9 [1, 2] : vector<1x8x1xf32> to vector<1xf32>
    %33 = vector.shape_cast %32 : vector<1xf32> to vector<1x1x1xf32>
    %34 = vector.extract %33[0, 0, 0] : f32 from vector<1x1x1xf32>
    %35 = arith.addf %30, %34 : f32
    %c0_10 = arith.constant 0 : index
    %36 = memref.load %arg4[%c0_10] : memref<1xf32, #tpu.memory_space<smem>>
    memref.store %35, %arg4[%c0_10] : memref<1xf32, #tpu.memory_space<smem>>
    %c0_i32_11 = arith.constant 0 : i32
    %37 = arith.cmpi eq, %arg0, %c0_i32_11 : i32
    %38 = arith.extui %37 : i1 to i32
    %c0_i32_12 = arith.constant 0 : i32
    %39 = arith.cmpi ne, %38, %c0_i32_12 : i32
    scf.if %39 {
      %c0_13 = arith.constant 0 : index
      %40 = memref.load %arg4[%c0_13] : memref<1xf32, #tpu.memory_space<smem>>
      %cst_14 = arith.constant 0.000000e+00 : f32
      %41 = arith.subf %cst_14, %40 : f32
      %cst_15 = arith.constant 1.250000e-01 : f32
      %42 = arith.mulf %41, %cst_15 : f32
      %c0_16 = arith.constant 0 : index
      %c0_17 = arith.constant 0 : index
      %43 = memref.load %arg3[%c0_16, %c0_17] : memref<1x1xf32, #tpu.memory_space<smem>>
      memref.store %42, %arg3[%c0_16, %c0_17] : memref<1x1xf32, #tpu.memory_space<smem>>
    } else {
    }
    return
  }
  func.func @transform_0(%arg0: i32) -> i32 {
    %c0_i32 = arith.constant 0 : i32
    %c0_i32_0 = arith.constant 0 : i32
    return %c0_i32 : i32
  }
  func.func @transform_1(%arg0: i32) -> (i32, i32) {
    %c0_i32 = arith.constant 0 : i32
    %c0_i32_0 = arith.constant 0 : i32
    return %arg0, %c0_i32 : i32, i32
  }
  func.func @transform_2(%arg0: i32) -> (i32, i32) {
    %c0_i32 = arith.constant 0 : i32
    %c0_i32_0 = arith.constant 0 : i32
    %c0_i32_1 = arith.constant 0 : i32
    return %c0_i32, %c0_i32_0 : i32, i32
  }
}

</mosaic_0001>

<llo_original>
// kernel: tpu_custom_call.1
$region0: #{tpu_custom_call.1}
  #allocation0 [shape = 'u32[]', space=smem, size = 0x4, offset = 0x4, fixed_abs, tag = 'smem constant byte address 0x4 - core index']
  #allocation1 [shape = 'u32[144,128]{1,0:T(1,128)}', space=vmem, size = 0x12000, scoped, tag = 'internal scratch']
  #allocation2 [shape = 'f32[1]{0:T(128)}', space=smem, size = 0x200, scoped, tag = 'scratch operand']
  #allocation3 [shape = 's32[1]{0:T(128)S(6)}', space=smem, size = 0x200, scoped, tag = 'scoped memory for tpu_custom_call.1']
  %s0 = inlined_call_operand.<no memory space> [shape: s32[1], index: 0, kind: input, shape index: {}]
  %s1 = inlined_call_operand.hbm [shape: f32[8,16], index: 1, kind: input, shape index: {}]
  %s2 = inlined_call_operand.hbm [shape: f32[1,1], index: 2, kind: output, shape index: {}]
  %s3 = sld [smem:[#allocation0]]
  $region30: #{tpu_custom_call.1} parent=0
    _
  %s5 = ssub.s32 1, %s3
  %s6 = scalar_select 0, %s5, %s3
  %7 = sst [smem:[#allocation3]] %s0
  $region1: #{tpu_custom_call.1} parent=0
    #allocation4 [shape = 'u8[4096]{0}', space=vmem, size = 0x1000, scoped, tag = 'input window, operand 1, single buffered']
    #allocation5 [shape = 's32[1]{0}', space=sflag, size = 0x4, scoped, tag = 'scoped memory for tpu_custom_call.1']
    #allocation6 [shape = 's32[1]{0}', space=sflag, size = 0x4, scoped, tag = 'scoped memory for tpu_custom_call.1']
    #allocation7 [shape = 'u8[512]{0}', space=smem, size = 0x200, scoped, tag = 'output window, operand 0, single buffered']
    %8 = vsyncpa [#allocation5], 0
    %9 = vsyncpa [#allocation6], 0
    // Predicated region
    $region2: #{tpu_custom_call.1} parent=1 // pred_check
      _
    $region3: #{tpu_custom_call.1} parent=1 // pred_check_branch
      %11 = sbr.rel (0) target = $region5
    $region4: #{tpu_custom_call.1} parent=1 // pred_region
      _
    $region5: #{tpu_custom_call.1} parent=1 // pred_fallthru
      _
    // Predicated region
    $region6: #{tpu_custom_call.1} parent=1 // pred_check
      _
    $region7: #{tpu_custom_call.1} parent=1 // pred_check_branch
      %13 = sbr.rel (0) target = $region9
    $region8: #{tpu_custom_call.1} parent=1 // pred_region
      %s15 = ssub.s32 128, 128
      %16 = vsyncadd [#allocation5], %s15
      %s18 = sshll.u32 [#allocation4], 4
      %s19 = int_to_ptr.vmem [resolvable:$true] %s18
      %21 = dma.hbm_to_vmem [thread:$0]  %s1, 128, %s19, [#allocation5]
    $region9: #{tpu_custom_call.1} parent=1 // pred_fallthru
      _
    // Predicated region
    $region10: #{tpu_custom_call.1} parent=1 // pred_check
      _
    $region11: #{tpu_custom_call.1} parent=1 // pred_check_branch
      %23 = sbr.rel (0) target = $region13
    $region12: #{tpu_custom_call.1} parent=1 // pred_region
      %24 = dma.done [#allocation5], 128
    $region13: #{tpu_custom_call.1} parent=1 // pred_fallthru
      _
    %p25 = scmp.eq.s32.totalorder 0, 0
    // Predicated region
    $region14: #{tpu_custom_call.1} parent=1 // pred_check
      %p26 = pneg %p25
    $region15: #{tpu_custom_call.1} parent=1 // pred_check_branch
      %28 = sbr.rel (%p26) target = $region17
    $region16: #{tpu_custom_call.1} parent=1 // pred_region
      %s29 = scalar_lea.smem [#allocation2], 0
      %30 = sst [smem:[%s29]] 0.0
    $region17: #{tpu_custom_call.1} parent=1 // pred_fallthru
      _
    %v31 = vld [vmem:[#allocation4] sm:$0xff]
    %s32 = sld [smem:[#allocation3]]
    %vm33 = vcmask 130048
    %v34 = vsel %vm33, %v31, -inf
    %35 = vmax.xlane.f32.xlu0 %v34
    %v36 = vpop.xlane.xlu0 %35
    %v37 = vsub.f32 %v31, %v36
    %v38 = vmul.f32 %v37, 1.442695
    %v39 = vpow.pop %v38
    %v40 = vsel %vm33, %v39, 0.0
    %41 = vadd.xlane.f32.xlu0 %v40
    %v42 = vpop.xlane.xlu0 %41
    %v43 = vlog2.pop %v42
    %v44 = vmul.f32 %v43, 0.6931472
    %v45 = vlaneseq
    %v46 = vand.u32 %v45, 127
    %v47 = vstv %s32
    %vm48 = vcmp.eq.s32.totalorder %v46, %v47
    %v49 = vsel %vm48, %v31, 0.0
    %v50 = vsel %vm33, %v49, 0.0
    %51 = vadd.xlane.f32.xlu0 %v50
    %v52 = vpop.xlane.xlu0 %51
    %v53 = vsub.f32 %v52, %v36
    %v54 = vsub.f32 %v53, %v44
    %v55 = vlaneseq
    %v56 = vshrl.u32 %v55, 7
    %s57 = smul.u32 0, 8
    %v58 = vstv %s57
    %v59 = vadd.s32 %v56, %v58
    %vm60 = vcmp.lt.s32.totalorder %v59, 8
    %v61 = vsel %vm60, %v54, 0.0
    %s62 = sld [smem:[#allocation2]]
    %vm63 = vcmask 7168
    %v64 = vsel %vm63, %v61, 0.0
    %65 = vadd.xlane.f32.xlu0 %v64
    %v66 = vpop.xlane.xlu0 %65
    %v67 = vrot.slane %v66, 4
    %v68 = vadd.f32 %v66, %v67
    %v69 = vrot.slane %v68, 2
    %v70 = vadd.f32 %v68, %v69
    %v71 = vrot.slane %v70, 1
    %v72 = vadd.f32 %v70, %v71
    %s73 = vtos %v72
    %s74 = sadd.f32 %s62, %s73
    %s75 = scalar_lea.smem [#allocation2], 0
    %76 = sst [smem:[%s75]] %s74
    // Predicated region
    $region18: #{tpu_custom_call.1} parent=1 // pred_check
      %p77 = pneg %p25
    $region19: #{tpu_custom_call.1} parent=1 // pred_check_branch
      %79 = sbr.rel (%p77) target = $region21
    $region20: #{tpu_custom_call.1} parent=1 // pred_region
      %s80 = sld [smem:[#allocation2]]
      %s81 = ssub.f32 0.0, %s80
      %s82 = smul.f32 %s81, 0.125
      %s83 = scalar_lea.smem [#allocation7], 0
      %84 = sst [smem:[%s83]] %s82
    $region21: #{tpu_custom_call.1} parent=1 // pred_fallthru
      _
    // Predicated region
    $region22: #{tpu_custom_call.1} parent=1 // pred_check
      _
    $region23: #{tpu_custom_call.1} parent=1 // pred_check_branch
      %86 = sbr.rel (0) target = $region25
    $region24: #{tpu_custom_call.1} parent=1 // pred_region
      %s88 = ssub.s32 16, 16
      %89 = vsyncadd [#allocation6], %s88
      %92 = dma.smem_to_hbm [#allocation7], 16, %s2, [#allocation6]
    $region25: #{tpu_custom_call.1} parent=1 // pred_fallthru
      _
    // Predicated region
    $region26: #{tpu_custom_call.1} parent=1 // pred_check
      _
    $region27: #{tpu_custom_call.1} parent=1 // pred_check_branch
      %94 = sbr.rel (0) target = $region29
    $region28: #{tpu_custom_call.1} parent=1 // pred_region
      %95 = dma.done [#allocation6], 16
    $region29: #{tpu_custom_call.1} parent=1 // pred_fallthru
      _
    %96 = sfence
    %97 = vsyncpa [#allocation5], 1
    %98 = vsyncpa [#allocation6], 1

</llo_original>
